<compile_context>
chip_gen: v7x
topology: tpu7x:2x2x1
jax: 0.10.0
libtpu: 0.0.40
codegen_flags: <defaults>
</compile_context>

<pallas_src>
import jax
import jax.numpy as jnp
import numpy as np
from jax.experimental import pallas as pl
from jax.experimental.pallas import tpu as pltpu


def attention_kernel(hidden_ref, enc_ref, mask_ref, wagg_ref, bagg_ref,
                     ctx_ref, attw_ref, agg_ref):
    hidden = hidden_ref[...]                        # (Bt, H)    f32
    enc = enc_ref[...]                              # (Bt, S, H) f32
    mask = mask_ref[...]                            # (Bt, S)    int32

    # energy[b, s] = <enc[b, s, :], hidden[b, :]>   (VPU mul + lane-axis reduce)
    energy = jnp.sum(enc * hidden[:, None, :], axis=-1)            # (Bt, S)

    # masked_fill(mask == 0, -inf), then softmax over the sequence axis.
    energy = jnp.where(mask == 0, jnp.float32(-jnp.inf), energy)
    m = jnp.max(energy, axis=-1, keepdims=True)
    p = jnp.exp(energy - m)
    denom = jnp.sum(p, axis=-1, keepdims=True)
    attw = p * pl.reciprocal(denom, approx=True)                   # (Bt, S)

    # context[b, h] = sum_s enc[b, s, h] * attw[b, s]  (sublane reduce)
    context = jnp.sum(enc * attw[:, :, None], axis=1)              # (Bt, H)

    # aggregate_fc: bf16 x bf16 MXU matmul, f32 accumulation, f32 bias.
    agg = jnp.dot(context.astype(jnp.bfloat16), wagg_ref[...],
                  preferred_element_type=jnp.float32) + bagg_ref[...]

    ctx_ref[...] = context
    attw_ref[...] = attw
    agg_ref[...] = agg


def _choose_block_b(B, S, H, E, block_b, vmem_budget=64 * 1024 * 1024):
    """Largest batch tile <= block_b whose double-buffered tiles fit the budget."""
    bt = min(B, block_b)
    while bt > 8:
        per_step = 2 * 4 * (bt * H + bt * S * H + bt * S)      # inputs  (f32, 2-buf)
        per_step += 2 * 4 * (bt * H + bt * S + bt * E)         # outputs (f32, 2-buf)
        per_step += 2 * H * E + 4 * E                          # resident weights
        if per_step <= vmem_budget:
            break
        bt //= 2
    return max(bt, 1)


def attention_forward(hidden, encoder_outputs, mask, w_agg, b_agg, *,
                      block_b=128):
    """Pallas forward pass of the PyTorch `Attention` module.

    hidden:          (B, H) f32
    encoder_outputs: (B, S, H) f32
    mask:            (B, S) int  (0 = masked out)
    w_agg:           (H, E) f32  (transpose of torch Linear.weight)
    b_agg:           (E,)   f32
    Returns (context (B,H), attention_weights (B,S), aggregated (B,E)).
    """
    B, S, H = encoder_outputs.shape
    E = w_agg.shape[1]

    bt = _choose_block_b(B, S, H, E, block_b)       # batch rows per grid step
    nb = pl.cdiv(B, bt)
    bp = nb * bt
    if bp != B:                          # pad batch to a multiple of the tile
        pad = bp - B
        hidden = jnp.pad(hidden, ((0, pad), (0, 0)))
        encoder_outputs = jnp.pad(encoder_outputs, ((0, pad), (0, 0), (0, 0)))
        mask = jnp.pad(mask, ((0, pad), (0, 0)), constant_values=1)

    w_agg_bf16 = w_agg.astype(jnp.bfloat16)          # half the weight DMA bytes
    b_agg_2d = b_agg.reshape(1, E).astype(jnp.float32)

    in_specs = [
        pl.BlockSpec((bt, H), lambda b: (b, 0)),          # hidden
        pl.BlockSpec((bt, S, H), lambda b: (b, 0, 0)),    # encoder_outputs
        pl.BlockSpec((bt, S), lambda b: (b, 0)),          # mask
        pl.BlockSpec((H, E), lambda b: (0, 0)),           # W_agg (grid-resident)
        pl.BlockSpec((1, E), lambda b: (0, 0)),           # b_agg (grid-resident)
    ]
    out_specs = (
        pl.BlockSpec((bt, H), lambda b: (b, 0)),          # context
        pl.BlockSpec((bt, S), lambda b: (b, 0)),          # attention weights
        pl.BlockSpec((bt, E), lambda b: (b, 0)),          # aggregated embedding
    )
    out_shapes = (
        jax.ShapeDtypeStruct((bp, H), jnp.float32),
        jax.ShapeDtypeStruct((bp, S), jnp.float32),
        jax.ShapeDtypeStruct((bp, E), jnp.float32),
    )

    # VMEM limit: tile footprint with ~1.5x headroom, clamped to [32 MiB, 100 MiB].
    tile_bytes = (2 * 4 * (bt * H + bt * S * H + bt * S)
                  + 2 * 4 * (bt * H + bt * S + bt * E)
                  + 2 * H * E + 4 * E)
    vmem_limit = int(min(max(32 * 1024 * 1024, 3 * tile_bytes // 2),
                         100 * 1024 * 1024))

    ctx, attw, agg = pl.pallas_call(
        attention_kernel,
        out_shape=out_shapes,
        grid_spec=pltpu.PrefetchScalarGridSpec(
            num_scalar_prefetch=0,
            grid=(nb,),
            in_specs=in_specs,
            out_specs=out_specs,
        ),
        compiler_params=pltpu.CompilerParams(
            dimension_semantics=("parallel",),   # batch tiles are independent
            vmem_limit_bytes=vmem_limit,
        ),
    )(hidden, encoder_outputs, mask, w_agg_bf16, b_agg_2d)

    return ctx[:B], attw[:B], agg[:B]


def attention_ref(hidden, enc, mask, w_agg, b_agg):
    """Pure-JAX f32 reference matching the PyTorch forward."""
    energy = jnp.einsum('bsh,bh->bs', enc, hidden)
    energy = jnp.where(mask == 0, -jnp.inf, energy)
    attw = jax.nn.softmax(energy, axis=1)
    context = jnp.einsum('bsh,bs->bh', enc, attw)
    agg = context @ w_agg + b_agg
    return context, attw, agg


if __name__ == "__main__":
    # batch=2, seq=8, hidden_dim=32, embedding_dim=64
    B, S, H, E = 2, 8, 32, 64
    key = jax.random.PRNGKey(0)
    kh, ke, km, kw, kb = jax.random.split(key, 5)

    hidden = jax.random.normal(kh, (B, H), jnp.float32)
    encoder_outputs = jax.random.normal(ke, (B, S, H), jnp.float32)
    mask = (jax.random.uniform(km, (B, S)) > 0.3).astype(jnp.int32)
    mask = mask.at[:, 0].set(1)            # keep >=1 valid position per row

    bound = 1.0 / np.sqrt(H)               # PyTorch nn.Linear default init scale
    w_agg = jax.random.uniform(kw, (H, E), jnp.float32, -bound, bound)
    b_agg = jax.random.uniform(kb, (E,), jnp.float32, -bound, bound)

    ctx, attw, agg = attention_forward(hidden, encoder_outputs, mask, w_agg, b_agg)
    jax.block_until_ready((ctx, attw, agg))

    ctx_r, attw_r, agg_r = attention_ref(hidden, encoder_outputs, mask, w_agg, b_agg)
    np.testing.assert_allclose(np.asarray(attw), np.asarray(attw_r), rtol=3e-2, atol=3e-2)
    np.testing.assert_allclose(np.asarray(ctx), np.asarray(ctx_r), rtol=3e-2, atol=3e-2)
    np.testing.assert_allclose(np.asarray(agg), np.asarray(agg_r), rtol=3e-2, atol=3e-2)

    assert ctx.shape == (B, H) and attw.shape == (B, S) and agg.shape == (B, E)
    print("KERNEL_OK")
</pallas_src>

<mosaic_0001>
module attributes {stable_mosaic.version = 11 : i64} {
  func.func @attention_kernel(%arg0: i32, %arg1: memref<2x32xf32, #tpu.memory_space<vmem>>, %arg2: memref<2x8x32xf32, #tpu.memory_space<vmem>>, %arg3: memref<2x8xi32, #tpu.memory_space<vmem>>, %arg4: memref<32x64xbf16, #tpu.memory_space<vmem>>, %arg5: memref<1x64xf32, #tpu.memory_space<vmem>>, %arg6: memref<2x32xf32, #tpu.memory_space<vmem>>, %arg7: memref<2x8xf32, #tpu.memory_space<vmem>>, %arg8: memref<2x64xf32, #tpu.memory_space<vmem>>) attributes {dimension_semantics = [#tpu.dimension_semantics<parallel>], iteration_bounds = array<i64: 1>, scalar_prefetch = 0 : i64, scratch_operands = 0 : i64, tpu.core_type = #tpu.core_type<tc>, window_params = [{transform_indices = @transform_0, window_bounds = array<i64: 2, 32>}, {transform_indices = @transform_1, window_bounds = array<i64: 2, 8, 32>}, {transform_indices = @transform_2, window_bounds = array<i64: 2, 8>}, {pipeline_mode = #tpu.pipeline_mode<synchronous>, transform_indices = @transform_3, window_bounds = array<i64: 32, 64>}, {pipeline_mode = #tpu.pipeline_mode<synchronous>, transform_indices = @transform_4, window_bounds = array<i64: 1, 64>}, {transform_indices = @transform_5, window_bounds = array<i64: 2, 32>}, {transform_indices = @transform_6, window_bounds = array<i64: 2, 8>}, {transform_indices = @transform_7, window_bounds = array<i64: 2, 64>}]} {
    %c0 = arith.constant 0 : index
    %c0_0 = arith.constant 0 : index
    %0 = vector.load %arg1[%c0, %c0_0] : memref<2x32xf32, #tpu.memory_space<vmem>>, vector<2x32xf32>
    %c0_1 = arith.constant 0 : index
    %c0_2 = arith.constant 0 : index
    %c0_3 = arith.constant 0 : index
    %1 = vector.load %arg2[%c0_1, %c0_2, %c0_3] : memref<2x8x32xf32, #tpu.memory_space<vmem>>, vector<2x8x32xf32>
    %c0_4 = arith.constant 0 : index
    %c0_5 = arith.constant 0 : index
    %2 = vector.load %arg3[%c0_4, %c0_5] : memref<2x8xi32, #tpu.memory_space<vmem>>, vector<2x8xi32>
    %3 = vector.shape_cast %0 : vector<2x32xf32> to vector<2x1x32xf32>
    %4 = vector.broadcast %3 : vector<2x1x32xf32> to vector<2x8x32xf32>
    %5 = arith.mulf %1, %4 : vector<2x8x32xf32>
    %cst = arith.constant dense<0.000000e+00> : vector<2x8xf32>
    %6 = vector.multi_reduction <add>, %5, %cst [2] : vector<2x8x32xf32> to vector<2x8xf32>
    %c0_i32 = arith.constant 0 : i32
    %7 = vector.broadcast %c0_i32 : i32 to vector<2x8xi32>
    %8 = arith.cmpi eq, %2, %7 : vector<2x8xi32>
    %cst_6 = arith.constant 0xFF800000 : f32
    %9 = vector.broadcast %cst_6 : f32 to vector<2x8xf32>
    %10 = arith.select %8, %9, %6 : vector<2x8xi1>, vector<2x8xf32>
    %cst_7 = arith.constant dense<0xFF800000> : vector<2xf32>
    %11 = vector.multi_reduction <maximumf>, %10, %cst_7 [1] : vector<2x8xf32> to vector<2xf32>
    %12 = vector.shape_cast %11 : vector<2xf32> to vector<2x1xf32>
    %13 = vector.broadcast %12 : vector<2x1xf32> to vector<2x8xf32>
    %14 = arith.subf %10, %13 : vector<2x8xf32>
    %15 = math.exp %14 : vector<2x8xf32>
    %cst_8 = arith.constant dense<0.000000e+00> : vector<2xf32>
    %16 = vector.multi_reduction <add>, %15, %cst_8 [1] : vector<2x8xf32> to vector<2xf32>
    %17 = vector.shape_cast %16 : vector<2xf32> to vector<2x1xf32>
    %18 = tpu.reciprocal %17 {approx = true} : vector<2x1xf32> -> vector<2x1xf32>
    %19 = vector.broadcast %18 : vector<2x1xf32> to vector<2x8xf32>
    %20 = arith.mulf %15, %19 : vector<2x8xf32>
    %21 = vector.shape_cast %20 : vector<2x8xf32> to vector<2x8x1xf32>
    %22 = vector.broadcast %21 : vector<2x8x1xf32> to vector<2x8x32xf32>
    %23 = arith.mulf %1, %22 : vector<2x8x32xf32>
    %cst_9 = arith.constant dense<0.000000e+00> : vector<2x32xf32>
    %24 = vector.multi_reduction <add>, %23, %cst_9 [1] : vector<2x8x32xf32> to vector<2x32xf32>
    %25 = arith.truncf %24 : vector<2x32xf32> to vector<2x32xbf16>
    %c0_10 = arith.constant 0 : index
    %c0_11 = arith.constant 0 : index
    %26 = vector.load %arg4[%c0_10, %c0_11] : memref<32x64xbf16, #tpu.memory_space<vmem>>, vector<32x64xbf16>
    %cst_12 = arith.constant dense<0.000000e+00> : vector<2x64xf32>
    %27 = tpu.matmul %25, %26, %cst_12 {dimension_numbers = #tpu.dot_dimension_numbers<[1], [0], [0], [1], [0, 0, 1, 1], [], []>} : vector<2x32xbf16>, vector<32x64xbf16>, vector<2x64xf32> -> vector<2x64xf32>
    %c0_13 = arith.constant 0 : index
    %c0_14 = arith.constant 0 : index
    %28 = vector.load %arg5[%c0_13, %c0_14] : memref<1x64xf32, #tpu.memory_space<vmem>>, vector<1x64xf32>
    %29 = vector.broadcast %28 : vector<1x64xf32> to vector<2x64xf32>
    %30 = arith.addf %27, %29 : vector<2x64xf32>
    %c0_15 = arith.constant 0 : index
    %c0_16 = arith.constant 0 : index
    %31 = vector.load %arg6[%c0_15, %c0_16] : memref<2x32xf32, #tpu.memory_space<vmem>>, vector<2x32xf32>
    tpu.vector_store %arg6[%c0_15, %c0_16], %24 {strides = array<i32>} : memref<2x32xf32, #tpu.memory_space<vmem>>, vector<2x32xf32>,
    %c0_17 = arith.constant 0 : index
    %c0_18 = arith.constant 0 : index
    %32 = vector.load %arg7[%c0_17, %c0_18] : memref<2x8xf32, #tpu.memory_space<vmem>>, vector<2x8xf32>
    tpu.vector_store %arg7[%c0_17, %c0_18], %20 {strides = array<i32>} : memref<2x8xf32, #tpu.memory_space<vmem>>, vector<2x8xf32>,
    %c0_19 = arith.constant 0 : index
    %c0_20 = arith.constant 0 : index
    %33 = vector.load %arg8[%c0_19, %c0_20] : memref<2x64xf32, #tpu.memory_space<vmem>>, vector<2x64xf32>
    tpu.vector_store %arg8[%c0_19, %c0_20], %30 {strides = array<i32>} : memref<2x64xf32, #tpu.memory_space<vmem>>, vector<2x64xf32>,
    return
  }
  func.func @transform_0(%arg0: i32) -> (i32, i32) {
    %c0_i32 = arith.constant 0 : i32
    %c0_i32_0 = arith.constant 0 : i32
    return %arg0, %c0_i32 : i32, i32
  }
  func.func @transform_1(%arg0: i32) -> (i32, i32, i32) {
    %c0_i32 = arith.constant 0 : i32
    %c0_i32_0 = arith.constant 0 : i32
    %c0_i32_1 = arith.constant 0 : i32
    return %arg0, %c0_i32, %c0_i32_0 : i32, i32, i32
  }
  func.func @transform_2(%arg0: i32) -> (i32, i32) {
    %c0_i32 = arith.constant 0 : i32
    %c0_i32_0 = arith.constant 0 : i32
    return %arg0, %c0_i32 : i32, i32
  }
  func.func @transform_3(%arg0: i32) -> (i32, i32) {
    %c0_i32 = arith.constant 0 : i32
    %c0_i32_0 = arith.constant 0 : i32
    %c0_i32_1 = arith.constant 0 : i32
    return %c0_i32, %c0_i32_0 : i32, i32
  }
  func.func @transform_4(%arg0: i32) -> (i32, i32) {
    %c0_i32 = arith.constant 0 : i32
    %c0_i32_0 = arith.constant 0 : i32
    %c0_i32_1 = arith.constant 0 : i32
    return %c0_i32, %c0_i32_0 : i32, i32
  }
  func.func @transform_5(%arg0: i32) -> (i32, i32) {
    %c0_i32 = arith.constant 0 : i32
    %c0_i32_0 = arith.constant 0 : i32
    return %arg0, %c0_i32 : i32, i32
  }
  func.func @transform_6(%arg0: i32) -> (i32, i32) {
    %c0_i32 = arith.constant 0 : i32
    %c0_i32_0 = arith.constant 0 : i32
    return %arg0, %c0_i32 : i32, i32
  }
  func.func @transform_7(%arg0: i32) -> (i32, i32) {
    %c0_i32 = arith.constant 0 : i32
    %c0_i32_0 = arith.constant 0 : i32
    return %arg0, %c0_i32 : i32, i32
  }
}

</mosaic_0001>

<llo_original>
// kernel: tpu_custom_call.1
$region0: #{tpu_custom_call.1}
  #allocation0 [shape = 'u32[]', space=smem, size = 0x4, offset = 0x4, fixed_abs, tag = 'smem constant byte address 0x4 - core index']
  #allocation1 [shape = 'u32[144,128]{1,0:T(1,128)}', space=vmem, size = 0x12000, scoped, tag = 'internal scratch']
  %s0 = inlined_call_operand.hbm [shape: f32[2,32], index: 0, kind: input, shape index: {}]
  %s1 = inlined_call_operand.hbm [shape: f32[2,8,32], index: 1, kind: input, shape index: {}]
  %s2 = inlined_call_operand.vmem [shape: s32[2,8], index: 2, kind: input, shape index: {}]
  %s3 = inlined_call_operand.hbm [shape: bf16[32,64], index: 3, kind: input, shape index: {}]
  %s4 = inlined_call_operand.vmem [shape: f32[1,64], index: 4, kind: input, shape index: {}]
  %s5 = inlined_call_operand.hbm [shape: f32[2,32], index: 5, kind: output, shape index: {0}]
  %s6 = inlined_call_operand.hbm [shape: f32[2,8], index: 6, kind: output, shape index: {1}]
  %s7 = inlined_call_operand.hbm [shape: f32[2,64], index: 7, kind: output, shape index: {2}]
  %8 = xla_tuple %s5, %s6, %s7
  %s9 = sld [smem:[#allocation0]]
  $region58: #{tpu_custom_call.1} parent=0
    _
  %s11 = ssub.s32 1, %s9
  %s12 = scalar_select 0, %s11, %s9
  $region1: #{tpu_custom_call.1} parent=0
    #allocation2 [shape = 'u8[1024]{0}', space=vmem, size = 0x400, scoped, tag = 'input window, operand 0, single buffered']
    #allocation3 [shape = 's32[1]{0}', space=sflag, size = 0x4, scoped, tag = 'scoped memory for tpu_custom_call.1']
    #allocation4 [shape = 's32[1]{0}', space=sflag, size = 0x4, scoped, tag = 'scoped memory for tpu_custom_call.1']
    #allocation5 [shape = 'u8[8192]{0}', space=vmem, size = 0x2000, scoped, tag = 'input window, operand 1, single buffered']
    #allocation6 [shape = 's32[1]{0}', space=sflag, size = 0x4, scoped, tag = 'scoped memory for tpu_custom_call.1']
    #allocation7 [shape = 'u8[8192]{0}', space=vmem, size = 0x2000, scoped, tag = 'input window, operand 3, single buffered']
    #allocation8 [shape = 'u8[1024]{0}', space=vmem, size = 0x400, scoped, tag = 'output window, operand 0, single buffered']
    #allocation9 [shape = 'u8[1024]{0}', space=vmem, size = 0x400, scoped, tag = 'output window, operand 1, single buffered']
    #allocation10 [shape = 's32[1]{0}', space=sflag, size = 0x4, scoped, tag = 'scoped memory for tpu_custom_call.1']
    #allocation11 [shape = 'u8[1024]{0}', space=vmem, size = 0x400, scoped, tag = 'output window, operand 2, single buffered']
    %13 = vsyncpa [#allocation3], 0
    %14 = vsyncpa [#allocation6], 0
    %15 = vsyncpa [#allocation4], 0
    %16 = vsyncpa [#allocation10], 0
    // Predicated region
    $region2: #{tpu_custom_call.1} parent=1 // pred_check
      _
    $region3: #{tpu_custom_call.1} parent=1 // pred_check_branch
      %18 = sbr.rel (0) target = $region5
    $region4: #{tpu_custom_call.1} parent=1 // pred_region
      %s20 = ssub.s32 32, 32
      %21 = vsyncadd [#allocation3], %s20
      %s23 = sshll.u32 [#allocation2], 4
      %s24 = int_to_ptr.vmem [resolvable:$true] %s23
      %26 = dma.hbm_to_vmem [thread:$0]  %s0, 32, %s24, [#allocation3]
    $region5: #{tpu_custom_call.1} parent=1 // pred_fallthru
      _
    // Predicated region
    $region6: #{tpu_custom_call.1} parent=1 // pred_check
      _
    $region7: #{tpu_custom_call.1} parent=1 // pred_check_branch
      %28 = sbr.rel (0) target = $region9
    $region8: #{tpu_custom_call.1} parent=1 // pred_region
      %s30 = ssub.s32 256, 256
      %31 = vsyncadd [#allocation6], %s30
      %s32 = sshll.u32 [#allocation5], 4
      %s33 = int_to_ptr.vmem [resolvable:$true] %s32
      %38 = dma.hbm_to_vmem [thread:$0]  %s1, 256, %s33, [#allocation6], 128, 128, 8
    $region9: #{tpu_custom_call.1} parent=1 // pred_fallthru
      _
    // Predicated region
    $region10: #{tpu_custom_call.1} parent=1 // pred_check
      _
    $region11: #{tpu_custom_call.1} parent=1 // pred_check_branch
      %40 = sbr.rel (0) target = $region13
    $region12: #{tpu_custom_call.1} parent=1 // pred_region
      _
    $region13: #{tpu_custom_call.1} parent=1 // pred_fallthru
      _
    // Predicated region
    $region14: #{tpu_custom_call.1} parent=1 // pred_check
      _
    $region15: #{tpu_custom_call.1} parent=1 // pred_check_branch
      %42 = sbr.rel (0) target = $region17
    $region16: #{tpu_custom_call.1} parent=1 // pred_region
      %s44 = ssub.s32 256, 256
      %45 = vsyncadd [#allocation6], %s44
      %s46 = sshll.u32 [#allocation7], 4
      %s47 = int_to_ptr.vmem [resolvable:$true] %s46
      %52 = dma.hbm_to_vmem [thread:$0]  %s3, 256, %s47, [#allocation6], 64, 64, 4
    $region17: #{tpu_custom_call.1} parent=1 // pred_fallthru
      _
    // Predicated region
    $region18: #{tpu_custom_call.1} parent=1 // pred_check
      _
    $region19: #{tpu_custom_call.1} parent=1 // pred_check_branch
      %54 = sbr.rel (0) target = $region21
    $region20: #{tpu_custom_call.1} parent=1 // pred_region
      _
    $region21: #{tpu_custom_call.1} parent=1 // pred_fallthru
      _
    // Predicated region
    $region22: #{tpu_custom_call.1} parent=1 // pred_check
      _
    $region23: #{tpu_custom_call.1} parent=1 // pred_check_branch
      %56 = sbr.rel (0) target = $region25
    $region24: #{tpu_custom_call.1} parent=1 // pred_region
      %57 = dma.done [#allocation3], 32
    $region25: #{tpu_custom_call.1} parent=1 // pred_fallthru
      _
    // Predicated region
    $region26: #{tpu_custom_call.1} parent=1 // pred_check
      _
    $region27: #{tpu_custom_call.1} parent=1 // pred_check_branch
      %59 = sbr.rel (0) target = $region29
    $region28: #{tpu_custom_call.1} parent=1 // pred_region
      %60 = dma.done [#allocation6], 256
    $region29: #{tpu_custom_call.1} parent=1 // pred_fallthru
      _
    // Predicated region
    $region30: #{tpu_custom_call.1} parent=1 // pred_check
      _
    $region31: #{tpu_custom_call.1} parent=1 // pred_check_branch
      %62 = sbr.rel (0) target = $region33
    $region32: #{tpu_custom_call.1} parent=1 // pred_region
      %63 = dma.done [#allocation6], 256
    $region33: #{tpu_custom_call.1} parent=1 // pred_fallthru
      _
    %v65 = vld [vmem:[#allocation2] sm:$0x3]
    %v66 = vld [vmem:[#allocation5] sm:$0xff]
    %v67 = vld [vmem:[#allocation5 + $0x8] sm:$0xff]
    %v68 = vld [vmem:[%s2] sm:$0x3]
    %v71 = vunpack.c.l.s4 1966171168
    %v72 = vunpack.c.0.s8 %v71
    %v73 = vlaneseq
    %v74 = vshrl.u32 %v73, 7
    %v75 = vsub.s32 %v72, %v74
    %v76 = vrot.slane %v65, %v75
    %v77 = vcombine.high %v76, %v76
    %v79 = vunpack.c.l.s4 1966171168
    %v80 = vunpack.c.0.s8 %v79
    %v81 = vlaneseq
    %v82 = vshrl.u32 %v81, 7
    %v83 = vsub.s32 %v80, %v82
    %v84 = vrot.slane %v76, %v83
    %v86 = vunpack.c.l.s4 1966171168
    %v87 = vunpack.c.0.s8 %v86
    %v88 = vlaneseq
    %v89 = vshrl.u32 %v88, 7
    %v90 = vsub.s32 %v87, %v89
    %v91 = vrot.slane %v77, %v90
    %v92 = vlaneseq
    %v93 = vshrl.u32 %v92, 7
    %v94 = vsub.s32 0, %v93
    %v95 = vrot.slane %v84, %v94
    %v96 = vlaneseq
    %v97 = vshrl.u32 %v96, 7
    %v98 = vsub.s32 0, %v97
    %v99 = vrot.slane %v91, %v98
    %v102 = vmul.f32 %v66, %v95
    %v103 = vmul.f32 %v67, %v99
    %vm104 = vcmask 261120
    %v105 = vsel %vm104, %v102, 0.0
    %106 = vadd.xlane.f32.xlu0 %v105
    %v107 = vpop.xlane.xlu0 %106
    %v108 = vsel %vm104, %v103, 0.0
    %109 = vadd.xlane.f32.xlu0 %v108
    %v110 = vpop.xlane.xlu0 %109
    %vm111 = vcmp.eq.s32.totalorder %v68, 0
    %v114 = vlaneseq
    %v115 = vand.u32 %v114, 127
    %v116 = vlaneseq
    %v117 = vshrl.u32 %v116, 7
    %v118 = vsub.s32 %v115, %v117
    %v119 = vrot.slane %v107, %v118
    %v120 = vlaneseq
    %v121 = vshrl.u32 %v120, 7
    %v122 = vsub.s32 %v115, %v121
    %v123 = vrot.slane %v110, %v122
    %vm124 = vcmask 1041409
    %v125 = vsel %vm124, %v123, %v119
    %v127 = vsel %vm111, -inf, %v125
    %vm128 = vcmask 58368
    %v129 = vsel %vm128, %v127, -inf
    %130 = vmax.xlane.f32.xlu0 %v129
    %v131 = vpop.xlane.xlu0 %130
    %v132 = vsub.f32 %v127, %v131
    %v133 = vmul.f32 %v132, 1.442695
    %v134 = vpow.pop %v133
    %v135 = vsel %vm128, %v134, 0.0
    %136 = vadd.xlane.f32.xlu0 %v135
    %v137 = vpop.xlane.xlu0 %136
    %v138 = vrcp.pop %v137
    %v139 = vmul.f32 %v134, %v138
    %v140 = vlaneseq
    %v141 = vshrl.u32 %v140, 7
    %v142 = vsub.s32 0, %v141
    %v143 = vrot.slane %v139, %v142
    %145 = vbcast.lane.b32.xlu0 %v143, 256
    %v146 = vpop.permute.xlu0 %145
    %v147 = vlaneseq
    %v148 = vshrl.u32 %v147, 7
    %v149 = vsub.s32 1, %v148
    %v150 = vrot.slane %v139, %v149
    %152 = vbcast.lane.b32.xlu0 %v150, 256
    %v153 = vpop.permute.xlu0 %152
    %v154 = vmul.f32 %v66, %v146
    %v155 = vmul.f32 %v67, %v153
    %v156 = vsel %vm104, %v154, 0.0
    %v157 = vrot.slane %v156, 4
    %v158 = vadd.f32 %v156, %v157
    %v159 = vrot.slane %v158, 2
    %v160 = vadd.f32 %v158, %v159
    %v161 = vrot.slane %v160, 1
    %v162 = vadd.f32 %v160, %v161
    %v163 = vsel %vm104, %v155, 0.0
    %v164 = vrot.slane %v163, 4
    %v165 = vadd.f32 %v163, %v164
    %v166 = vrot.slane %v165, 2
    %v167 = vadd.f32 %v165, %v166
    %v168 = vrot.slane %v167, 1
    %v169 = vadd.f32 %v167, %v168
    %v170 = vpack.c.bf16 %v162, %v162
    %v171 = vpack.c.bf16 %v169, %v169
    %v172 = vld [vmem:[#allocation7] sm:$0xf]
    %v173 = vld [vmem:[#allocation7 + $0x4] sm:$0xf]
    %v174 = vld [vmem:[#allocation7 + $0x8] sm:$0xf]
    %v175 = vld [vmem:[#allocation7 + $0xc] sm:$0xf]
    %v176 = vld [vmem:[%s4] sm:$0x1]
    %v178 = vlaneseq
    %v179 = vshrl.u32 %v178, 7
    %v180 = vsub.s32 0, %v179
    %v181 = vrot.slane %v176, %v180
    %v185 = vunpack.c.l.b16 %v170
    %v186 = vunpack.c.l.b16 %v171
    %v187 = vsel %vm124, %v186, %v185
    %v188 = vpack.c.b16 %v187, %v187
    %v193 = vunpack.c.l.b16 %v172
    %v194 = vunpack.c.l.b16 %v173
    %v195 = vunpack.c.l.b16 %v174
    %v196 = vunpack.c.l.b16 %v175
    %v197 = vpack.c.b16 %v194, %v193
    %v198 = vpack.c.b16 %v196, %v195
    %v202 = vsel %vm104, %v188, 0
    %204 = vmatprep.subr.bf16.mxu0 0
    %205 = vmatpush1.bf16.msra.mxu0 %v197
    %206 = vmatprep.subr.bf16.mxu0 0
    %207 = vmatpush1.bf16.msra.mxu0 %v198
    %208 = vmatprep.subr.bf16.mxu0 0
    %209 = vmatpush1.bf16.msra.mxu0 0
    %210 = vmatprep.subr.bf16.mxu0 0
    %211 = vmatpush1.bf16.msra.mxu0 0
    %212 = vmatprep.subr.bf16.mxu0 0
    %213 = vmatpush1.bf16.msra.mxu0 0
    %214 = vmatprep.subr.bf16.mxu0 0
    %215 = vmatpush1.bf16.msra.mxu0 0
    %216 = vmatprep.subr.bf16.mxu0 0
    %217 = vmatpush1.bf16.msra.mxu0 0
    %218 = vmatprep.subr.bf16.mxu0 0
    %219 = vmatpush1.bf16.msra.mxu0 0
    %220 = vmatprep.subr.bf16.mxu0 0
    %221 = vmatpush1.bf16.msra.mxu0 0
    %222 = vmatprep.subr.bf16.mxu0 0
    %223 = vmatpush1.bf16.msra.mxu0 0
    %224 = vmatprep.subr.bf16.mxu0 0
    %225 = vmatpush1.bf16.msra.mxu0 0
    %226 = vmatprep.subr.bf16.mxu0 0
    %227 = vmatpush1.bf16.msra.mxu0 0
    %228 = vmatprep.subr.bf16.mxu0 0
    %229 = vmatpush1.bf16.msra.mxu0 0
    %230 = vmatprep.subr.bf16.mxu0 0
    %231 = vmatpush1.bf16.msra.mxu0 0
    %232 = vmatprep.subr.bf16.mxu0 0
    %233 = vmatpush1.bf16.msra.mxu0 0
    %234 = vmatprep.subr.bf16.mxu0 0
    %235 = vmatpush1.bf16.msra.mxu0 0
    %236 = vmatprep.mubr.bf16.mxu0 0
    %237 = vmatmul.mubr.bf16.gmra.mrb[0].mxu0 %v202
    %v238 = vpop.f32.mrb[0].mxu0
    %v239 = vadd.f32 %v181, %v238
    %v240 = vpop.f32.mrb[0].mxu0
    %v241 = vpop.f32.mrb[0].mxu0
    %v242 = vpop.f32.mrb[0].mxu0
    %243 = vdwg.mxu0
    %v246 = vsel %vm124, %v169, %v162
    %vm248 = vcmask 254976
    %249 = vst.msk [vmem:[#allocation8] sm:$0x3] %vm248, %v246
    %250 = vst.msk [vmem:[#allocation9] sm:$0x3] %vm128, %v139
    %vm251 = vcmask 517120
    %252 = vst.msk [vmem:[#allocation11] sm:$0x3] %vm251, %v239
    // Predicated region
    $region34: #{tpu_custom_call.1} parent=1 // pred_check
      _
    $region35: #{tpu_custom_call.1} parent=1 // pred_check_branch
      %254 = sbr.rel (0) target = $region37
    $region36: #{tpu_custom_call.1} parent=1 // pred_region
      %s256 = ssub.s32 32, 32
      %257 = vsyncadd [#allocation4], %s256
      %s259 = sshll.u32 [#allocation8], 4
      %s260 = int_to_ptr.vmem [resolvable:$true] %s259
      %262 = dma.vmem_to_hbm [thread:$0]  %s260, 32, %s5, [#allocation4]
    $region37: #{tpu_custom_call.1} parent=1 // pred_fallthru
      _
    // Predicated region
    $region38: #{tpu_custom_call.1} parent=1 // pred_check
      _
    $region39: #{tpu_custom_call.1} parent=1 // pred_check_branch
      %264 = sbr.rel (0) target = $region41
    $region40: #{tpu_custom_call.1} parent=1 // pred_region
      %s266 = ssub.s32 32, 32
      %267 = vsyncadd [#allocation10], %s266
      %s269 = sshll.u32 [#allocation9], 4
      %s270 = int_to_ptr.vmem [resolvable:$true] %s269
      %272 = dma.vmem_to_hbm [thread:$0]  %s270, 32, %s6, [#allocation10]
    $region41: #{tpu_custom_call.1} parent=1 // pred_fallthru
      _
    // Predicated region
    $region42: #{tpu_custom_call.1} parent=1 // pred_check
      _
    $region43: #{tpu_custom_call.1} parent=1 // pred_check_branch
      %274 = sbr.rel (0) target = $region45
    $region44: #{tpu_custom_call.1} parent=1 // pred_region
      %s276 = ssub.s32 32, 32
      %277 = vsyncadd [#allocation10], %s276
      %s279 = sshll.u32 [#allocation11], 4
      %s280 = int_to_ptr.vmem [resolvable:$true] %s279
      %282 = dma.vmem_to_hbm [thread:$0]  %s280, 32, %s7, [#allocation10]
    $region45: #{tpu_custom_call.1} parent=1 // pred_fallthru
      _
    // Predicated region
    $region46: #{tpu_custom_call.1} parent=1 // pred_check
      _
    $region47: #{tpu_custom_call.1} parent=1 // pred_check_branch
      %284 = sbr.rel (0) target = $region49
    $region48: #{tpu_custom_call.1} parent=1 // pred_region
      %285 = dma.done [#allocation4], 32
    $region49: #{tpu_custom_call.1} parent=1 // pred_fallthru
      _
    // Predicated region
    $region50: #{tpu_custom_call.1} parent=1 // pred_check
      _
    $region51: #{tpu_custom_call.1} parent=1 // pred_check_branch
      %287 = sbr.rel (0) target = $region53
    $region52: #{tpu_custom_call.1} parent=1 // pred_region
      %288 = dma.done [#allocation10], 32
    $region53: #{tpu_custom_call.1} parent=1 // pred_fallthru
      _
    // Predicated region
    $region54: #{tpu_custom_call.1} parent=1 // pred_check
      _
    $region55: #{tpu_custom_call.1} parent=1 // pred_check_branch
      %290 = sbr.rel (0) target = $region57
    $region56: #{tpu_custom_call.1} parent=1 // pred_region
      %291 = dma.done [#allocation10], 32
    $region57: #{tpu_custom_call.1} parent=1 // pred_fallthru
      _
    %292 = vsyncpa [#allocation3], 1
    %293 = vsyncpa [#allocation6], 1
    %294 = vsyncpa [#allocation4], 1
    %295 = vsyncpa [#allocation10], 1

</llo_original>
